<compile_context>
chip_gen: v7x
topology: tpu7x:2x2x1
jax: 0.10.0
libtpu: 0.0.40
codegen_flags: <defaults>
</compile_context>

<pallas_src>
import functools

import jax
import jax.numpy as jnp
from jax.experimental import pallas as pl
from jax.experimental.pallas import tpu as pltpu


@functools.lru_cache(maxsize=None)
def _vmem_limit_bytes():
    # Generation-aware scoped-VMEM budget: ~7/8 of physical, capped at 112 MiB
    # (v5e/v6e: 128 MiB -> 112 MiB; v7x: 64 MiB -> 56 MiB).
    try:
        cap = int(pltpu.get_tpu_info().vmem_capacity_bytes)
    except Exception:
        cap = 64 * 1024 * 1024  # conservative fallback (v7x per-TC)
    return int(max(32 * 1024 * 1024, min(cap * 7 // 8, 112 * 1024 * 1024)))


def _batch_block(b):
    # Split batch across the grid only when blocks stay (8,128)-tile aligned.
    return 8 if (b % 8 == 0 and b > 8) else b


# ----------------------------- encoder kernel -----------------------------


def encoder_kernel(pooled_ref, wbb_ref, bbb_ref, wfc_ref, bfc_ref, out_ref):
    # pooled_ref: [Bb, C] (global-avg-pooled image), weights pre-transposed.
    feat = jnp.dot(pooled_ref[...], wbb_ref[...],
                   preferred_element_type=jnp.float32) + bbb_ref[...]       # [Bb, Fin]
    logits = jnp.dot(feat, wfc_ref[...],
                     preferred_element_type=jnp.float32) + bfc_ref[...]     # [Bb, E]
    # EncoderCNN.forward: dropout(relu(features)); dropout == identity (eval)
    out_ref[...] = jnp.maximum(logits, 0.0)


def encoder_forward(pooled, wbb_t, bbb, wfc_t, bfc):
    B, C = pooled.shape
    E = wfc_t.shape[1]
    bb = _batch_block(B)
    nb = B // bb
    return pl.pallas_call(
        encoder_kernel,
        grid=(nb,),
        in_specs=[pl.BlockSpec((bb, C), lambda i: (i, 0)),
                  pl.BlockSpec(wbb_t.shape, lambda i: (0, 0)),
                  pl.BlockSpec(bbb.shape, lambda i: (0, 0)),
                  pl.BlockSpec(wfc_t.shape, lambda i: (0, 0)),
                  pl.BlockSpec(bfc.shape, lambda i: (0, 0))],
        out_specs=pl.BlockSpec((bb, E), lambda i: (i, 0)),
        out_shape=jax.ShapeDtypeStruct((B, E), jnp.float32),
        compiler_params=pltpu.CompilerParams(
            dimension_semantics=("parallel",),
            vmem_limit_bytes=_vmem_limit_bytes()),
    )(pooled, wbb_t, bbb, wfc_t, bfc)


# ------------------- fused multi-layer LSTM kernel (decoder) -------------------


def decoder_lstm_kernel(*args, num_layers, hidden):
    # args = (x_ref, [wih4, whh4, b4] * L, out_ref, seq_scr, proj_scr)
    x_ref = args[0]
    wrefs = args[1:1 + 3 * num_layers]
    out_ref = args[1 + 3 * num_layers]
    seq_scr, proj_scr = args[2 + 3 * num_layers:]

    T, B, _ = x_ref.shape
    H = hidden

    for layer in range(num_layers):
        wih4, whh4, b4 = wrefs[3 * layer: 3 * layer + 3]

        # Layer input: original embeddings for layer 0, previous layer's
        # sequence (resident in VMEM scratch) otherwise.  The full read here
        # happens before the step loop overwrites seq_scr.
        x_in = x_ref[...] if layer == 0 else seq_scr[...]                   # [T, B, Ein]
        e_in = x_in.shape[-1]
        x_flat = x_in.reshape(T * B, e_in)

        # Hoisted input projection: ONE wide MXU matmul for the whole sequence
        # and all 4 gates, fused bias (b_ih + b_hh) folded in.
        proj_scr[...] = (
            jnp.dot(x_flat, wih4[...], preferred_element_type=jnp.float32)
            + b4[...]
        ).reshape(T, B, 4 * H)

        def step(t, carry):
            h, c = carry
            # Single [B,H] @ [H,4H] recurrent matmul; weight read at use site
            # (VMEM-resident ref, no hoisted value live across the loop).
            g = proj_scr[t] + jnp.dot(h, whh4[...],
                                      preferred_element_type=jnp.float32)   # [B, 4H]
            # PyTorch gate order: i, f, g, o — lane-aligned slices (H % 128 == 0).
            i_g = jax.nn.sigmoid(g[:, 0 * H:1 * H])
            f_g = jax.nn.sigmoid(g[:, 1 * H:2 * H])
            g_g = jnp.tanh(g[:, 2 * H:3 * H])
            o_g = jax.nn.sigmoid(g[:, 3 * H:4 * H])
            c_new = f_g * c + i_g * g_g
            h_new = o_g * jnp.tanh(c_new)
            seq_scr[t] = h_new
            return (h_new, c_new)

        h0 = jnp.zeros((B, H), jnp.float32)
        c0 = jnp.zeros((B, H), jnp.float32)
        jax.lax.fori_loop(0, T, step, (h0, c0), unroll=2)

    # Single dense bulk store of the final layer's full sequence output.
    out_ref[...] = seq_scr[...]


def decoder_lstm_forward(x, lstm_params):
    # x: [T, B, E]; lstm_params: per-layer dicts with fused-gate weights.
    T, B, E = x.shape
    H = lstm_params[0]["whh4"].shape[0]
    num_layers = len(lstm_params)
    bb = _batch_block(B)
    nb = B // bb

    flat = [x]
    in_specs = [pl.BlockSpec((T, bb, E), lambda i: (0, i, 0))]
    for lp in lstm_params:
        flat += [lp["wih4"], lp["whh4"], lp["b4"]]
        in_specs += [
            pl.BlockSpec(lp["wih4"].shape, lambda i: (0, 0)),
            pl.BlockSpec(lp["whh4"].shape, lambda i: (0, 0)),
            pl.BlockSpec(lp["b4"].shape, lambda i: (0, 0)),
        ]

    kernel = functools.partial(decoder_lstm_kernel,
                               num_layers=num_layers, hidden=H)
    return pl.pallas_call(
        kernel,
        grid=(nb,),
        in_specs=in_specs,
        out_specs=pl.BlockSpec((T, bb, H), lambda i: (0, i, 0)),
        out_shape=jax.ShapeDtypeStruct((T, B, H), jnp.float32),
        scratch_shapes=[
            pltpu.VMEM((T, bb, H), jnp.float32),       # layer-to-layer sequence buffer
            pltpu.VMEM((T, bb, 4 * H), jnp.float32),   # fused-gate input projections
        ],
        compiler_params=pltpu.CompilerParams(
            dimension_semantics=("parallel",),
            vmem_limit_bytes=_vmem_limit_bytes()),
    )(*flat)


# ----------------------------- tiled output projection -----------------------------


def linear_kernel(x_ref, w_ref, b_ref, out_ref):
    # x_ref: [N, H], w_ref: [H, TILE_V], b_ref: [1, TILE_V] -> out [N, TILE_V]
    out_ref[...] = (jnp.dot(x_ref[...], w_ref[...],
                            preferred_element_type=jnp.float32) + b_ref[...])


def linear_forward(x, w_t, b, *, tile_v=512):
    N, Hh = x.shape
    V = w_t.shape[1]
    # Lane-dense tiles >= 128; pad vocab to a tile multiple and trim after.
    tile_v = min(tile_v, pl.cdiv(V, 128) * 128)
    v_pad = pl.cdiv(V, tile_v) * tile_v
    if v_pad != V:
        w_t = jnp.pad(w_t, ((0, 0), (0, v_pad - V)))
        b = jnp.pad(b, ((0, 0), (0, v_pad - V)))
    out = pl.pallas_call(
        linear_kernel,
        grid=(v_pad // tile_v,),
        in_specs=[pl.BlockSpec((N, Hh), lambda j: (0, 0)),
                  pl.BlockSpec((Hh, tile_v), lambda j: (0, j)),
                  pl.BlockSpec((1, tile_v), lambda j: (0, j))],
        out_specs=pl.BlockSpec((N, tile_v), lambda j: (0, j)),
        out_shape=jax.ShapeDtypeStruct((N, v_pad), jnp.float32),
        compiler_params=pltpu.CompilerParams(
            dimension_semantics=("parallel",),
            vmem_limit_bytes=_vmem_limit_bytes()),
    )(x, w_t, b)
    return out[:, :V]


# ----------------------------- params / model -----------------------------


def init_params(key, *, embed_size, hidden_size, vocab_size, num_layers,
                channels, fc_in_features):
    ks = iter(jax.random.split(key, 16 + 8 * num_layers))

    def rnd(shape, scale=0.1):
        return scale * jax.random.normal(next(ks), shape, dtype=jnp.float32)

    params = {
        # Inception backbone stand-in: pooled channels -> fc_in_features
        "bb_w_t": rnd((channels, fc_in_features)),
        "bb_b": rnd((1, fc_in_features)),
        # replaced inception.fc: fc_in_features -> embed_size
        "fc_w_t": rnd((fc_in_features, embed_size)),
        "fc_b": rnd((1, embed_size)),
        # decoder
        "embed": rnd((vocab_size, embed_size)),
        "lin_w_t": rnd((hidden_size, vocab_size)),
        "lin_b": rnd((1, vocab_size)),
        "lstm": [],
    }
    for layer in range(num_layers):
        in_size = embed_size if layer == 0 else hidden_size
        # Fused-gate storage (PyTorch gate order i, f, g, o along the 4H axis),
        # pre-transposed so x @ w == x @ W^T; bias is fused b_ih + b_hh.
        params["lstm"].append({
            "wih4": rnd((in_size, 4 * hidden_size)),
            "whh4": rnd((hidden_size, 4 * hidden_size)),
            "b4": rnd((1, 4 * hidden_size)),
        })
    return params


def cnn_to_rnn_forward(params, images, captions):
    # EncoderCNN: inception(images).logits -> relu -> dropout (identity).
    # Backbone stand-in: global average pool (XLA) -> linear -> replaced fc.
    pooled = jnp.mean(images, axis=(2, 3))                                  # [B, C]
    features = encoder_forward(pooled, params["bb_w_t"], params["bb_b"],
                               params["fc_w_t"], params["fc_b"])            # [B, E]

    # DecoderRNN: embeddings = dropout(embed(captions))  (dropout == identity)
    emb = jnp.take(params["embed"], captions, axis=0)                       # [T, B, E]
    x = jnp.concatenate([features[None, :, :], emb], axis=0)               # [T+1, B, E]

    # Fused multi-layer LSTM (single pallas_call, activations stay in VMEM).
    hidden = decoder_lstm_forward(x, params["lstm"])                        # [T+1, B, Hh]

    Tp1, B2, Hh = hidden.shape
    out = linear_forward(hidden.reshape(Tp1 * B2, Hh),
                         params["lin_w_t"], params["lin_b"])                # [(T+1)*B, V]
    return out.reshape(Tp1, B2, -1)                                         # [T+1, B, V]


# ----------------------------- main -----------------------------


if __name__ == "__main__":
    # (8,128)-aligned small dims: B multiple of 8, E/H multiples of 128,
    # vocab multiple of 128 — keeps every reshape a free view and fills vregs.
    EMBED_SIZE = 128
    HIDDEN_SIZE = 128
    VOCAB_SIZE = 256
    NUM_LAYERS = 2
    FC_IN = 128          # stand-in for inception.fc.in_features
    B, C, HI, WI = 16, 4, 16, 16
    T = 8

    root = jax.random.PRNGKey(0)
    k_param, k_img, k_cap = jax.random.split(root, 3)

    params = init_params(
        k_param,
        embed_size=EMBED_SIZE, hidden_size=HIDDEN_SIZE, vocab_size=VOCAB_SIZE,
        num_layers=NUM_LAYERS, channels=C, fc_in_features=FC_IN,
    )

    images = jax.random.normal(k_img, (B, C, HI, WI), dtype=jnp.float32)
    captions = jax.random.randint(k_cap, (T, B), 0, VOCAB_SIZE, dtype=jnp.int32)

    outputs = cnn_to_rnn_forward(params, images, captions)
    outputs = jax.block_until_ready(outputs)

    assert outputs.shape == (T + 1, B, VOCAB_SIZE), outputs.shape
    assert outputs.dtype == jnp.float32
    assert bool(jnp.all(jnp.isfinite(outputs)))
    print("KERNEL_OK")
</pallas_src>

<mosaic_0001>
module attributes {stable_mosaic.version = 11 : i64} {
  func.func @encoder_kernel(%arg0: i32, %arg1: memref<8x4xf32, #tpu.memory_space<vmem>>, %arg2: memref<4x128xf32, #tpu.memory_space<vmem>>, %arg3: memref<1x128xf32, #tpu.memory_space<vmem>>, %arg4: memref<128x128xf32, #tpu.memory_space<vmem>>, %arg5: memref<1x128xf32, #tpu.memory_space<vmem>>, %arg6: memref<8x128xf32, #tpu.memory_space<vmem>>) attributes {dimension_semantics = [#tpu.dimension_semantics<parallel>], iteration_bounds = array<i64: 2>, scalar_prefetch = 0 : i64, scratch_operands = 0 : i64, tpu.core_type = #tpu.core_type<tc>, window_params = [{transform_indices = @transform_0, window_bounds = array<i64: 8, 4>}, {pipeline_mode = #tpu.pipeline_mode<synchronous>, transform_indices = @transform_1, window_bounds = array<i64: 4, 128>}, {pipeline_mode = #tpu.pipeline_mode<synchronous>, transform_indices = @transform_2, window_bounds = array<i64: 1, 128>}, {pipeline_mode = #tpu.pipeline_mode<synchronous>, transform_indices = @transform_3, window_bounds = array<i64: 128, 128>}, {pipeline_mode = #tpu.pipeline_mode<synchronous>, transform_indices = @transform_4, window_bounds = array<i64: 1, 128>}, {transform_indices = @transform_5, window_bounds = array<i64: 8, 128>}]} {
    %c0 = arith.constant 0 : index
    %c0_0 = arith.constant 0 : index
    %0 = vector.load %arg1[%c0, %c0_0] : memref<8x4xf32, #tpu.memory_space<vmem>>, vector<8x4xf32>
    %c0_1 = arith.constant 0 : index
    %c0_2 = arith.constant 0 : index
    %1 = vector.load %arg2[%c0_1, %c0_2] : memref<4x128xf32, #tpu.memory_space<vmem>>, vector<4x128xf32>
    %cst = arith.constant dense<0.000000e+00> : vector<8x128xf32>
    %2 = tpu.matmul %0, %1, %cst {dimension_numbers = #tpu.dot_dimension_numbers<[1], [0], [0], [1], [0, 0, 1, 1], [], []>} : vector<8x4xf32>, vector<4x128xf32>, vector<8x128xf32> -> vector<8x128xf32>
    %c0_3 = arith.constant 0 : index
    %c0_4 = arith.constant 0 : index
    %3 = vector.load %arg3[%c0_3, %c0_4] : memref<1x128xf32, #tpu.memory_space<vmem>>, vector<1x128xf32>
    %4 = vector.broadcast %3 : vector<1x128xf32> to vector<8x128xf32>
    %5 = arith.addf %2, %4 : vector<8x128xf32>
    %c0_5 = arith.constant 0 : index
    %c0_6 = arith.constant 0 : index
    %6 = vector.load %arg4[%c0_5, %c0_6] : memref<128x128xf32, #tpu.memory_space<vmem>>, vector<128x128xf32>
    %cst_7 = arith.constant dense<0.000000e+00> : vector<8x128xf32>
    %7 = tpu.matmul %5, %6, %cst_7 {dimension_numbers = #tpu.dot_dimension_numbers<[1], [0], [0], [1], [0, 0, 1, 1], [], []>} : vector<8x128xf32>, vector<128x128xf32>, vector<8x128xf32> -> vector<8x128xf32>
    %c0_8 = arith.constant 0 : index
    %c0_9 = arith.constant 0 : index
    %8 = vector.load %arg5[%c0_8, %c0_9] : memref<1x128xf32, #tpu.memory_space<vmem>>, vector<1x128xf32>
    %9 = vector.broadcast %8 : vector<1x128xf32> to vector<8x128xf32>
    %10 = arith.addf %7, %9 : vector<8x128xf32>
    %cst_10 = arith.constant 0.000000e+00 : f32
    %11 = vector.broadcast %cst_10 : f32 to vector<8x128xf32>
    %12 = arith.maximumf %10, %11 : vector<8x128xf32>
    %c0_11 = arith.constant 0 : index
    %c0_12 = arith.constant 0 : index
    %13 = vector.load %arg6[%c0_11, %c0_12] : memref<8x128xf32, #tpu.memory_space<vmem>>, vector<8x128xf32>
    tpu.vector_store %arg6[%c0_11, %c0_12], %12 {strides = array<i32>} : memref<8x128xf32, #tpu.memory_space<vmem>>, vector<8x128xf32>,
    return
  }
  func.func @transform_0(%arg0: i32) -> (i32, i32) {
    %c0_i32 = arith.constant 0 : i32
    %c0_i32_0 = arith.constant 0 : i32
    return %arg0, %c0_i32 : i32, i32
  }
  func.func @transform_1(%arg0: i32) -> (i32, i32) {
    %c0_i32 = arith.constant 0 : i32
    %c0_i32_0 = arith.constant 0 : i32
    %c0_i32_1 = arith.constant 0 : i32
    return %c0_i32, %c0_i32_0 : i32, i32
  }
  func.func @transform_2(%arg0: i32) -> (i32, i32) {
    %c0_i32 = arith.constant 0 : i32
    %c0_i32_0 = arith.constant 0 : i32
    %c0_i32_1 = arith.constant 0 : i32
    return %c0_i32, %c0_i32_0 : i32, i32
  }
  func.func @transform_3(%arg0: i32) -> (i32, i32) {
    %c0_i32 = arith.constant 0 : i32
    %c0_i32_0 = arith.constant 0 : i32
    %c0_i32_1 = arith.constant 0 : i32
    return %c0_i32, %c0_i32_0 : i32, i32
  }
  func.func @transform_4(%arg0: i32) -> (i32, i32) {
    %c0_i32 = arith.constant 0 : i32
    %c0_i32_0 = arith.constant 0 : i32
    %c0_i32_1 = arith.constant 0 : i32
    return %c0_i32, %c0_i32_0 : i32, i32
  }
  func.func @transform_5(%arg0: i32) -> (i32, i32) {
    %c0_i32 = arith.constant 0 : i32
    %c0_i32_0 = arith.constant 0 : i32
    return %arg0, %c0_i32 : i32, i32
  }
}

</mosaic_0001>

<llo_original>
// kernel: tpu_custom_call.1
$region0: #{tpu_custom_call.1}
  #allocation0 [shape = 'u32[]', space=smem, size = 0x4, offset = 0x4, fixed_abs, tag = 'smem constant byte address 0x4 - core index']
  #allocation1 [shape = 'u32[144,128]{1,0:T(1,128)}', space=vmem, size = 0x12000, scoped, tag = 'internal scratch']
  %s0 = inlined_call_operand.vmem [shape: f32[16,4], index: 0, kind: input, shape index: {}]
  %s1 = inlined_call_operand.vmem [shape: f32[4,128], index: 1, kind: input, shape index: {}]
  %s2 = inlined_call_operand.vmem [shape: f32[1,128], index: 2, kind: input, shape index: {}]
  %s3 = inlined_call_operand.hbm [shape: f32[128,128], index: 3, kind: input, shape index: {}]
  %s4 = inlined_call_operand.vmem [shape: f32[1,128], index: 4, kind: input, shape index: {}]
  %s5 = inlined_call_operand.hbm [shape: f32[16,128], index: 5, kind: output, shape index: {}]
  %s6 = sld [smem:[#allocation0]]
  $region57: #{tpu_custom_call.1} parent=0
    _
  %s8 = ssub.s32 1, %s6
  %s9 = scalar_select 0, %s8, %s6
  $region1: #{tpu_custom_call.1} parent=0
    #allocation2 [shape = 'u8[65536]{0}', space=vmem, size = 0x10000, scoped, tag = 'input window, operand 3, single buffered']
    #allocation3 [shape = 's32[2]{0}', space=sflag, size = 0x8, scoped, tag = 'scoped memory for tpu_custom_call.1']
    #allocation4 [shape = 's32[2]{0}', space=sflag, size = 0x8, scoped, tag = 'scoped memory for tpu_custom_call.1']
    #allocation5 [shape = 'u8[8192]{0}', space=vmem, size = 0x2000, scoped, tag = 'output window, operand 0']
    %10 = vsyncpa [#allocation3], 0
    %11 = vsyncpa [#allocation4], 0
    %s12 = scalar_lea.sflag [#allocation4], 1
    %13 = vsyncpa %s12, 0
    loop: start=0, step=1, limit=4
    $region2: #{tpu_custom_call.1} parent=1 // loop_pre_header
      _
    $region3: #{tpu_custom_call.1} parent=1 // loop_header
      %s15 = sphi 0, %s19
      %p16 = scmp.ge.s32.totalorder %s15, 4
      %s25 = sphi 0, %s27
      %s28 = sphi 0, %s25
      %s29 = sphi 0, %s28
      %s45 = sphi 0, %s29
      %s49 = sphi 0, %s49
      %s51 = sphi 0, %s49
      %s52 = sphi 0, %s51
      %s66 = sphi 0, %s52
      %s70 = sphi 0, %s70
      %s72 = sphi 0, %s70
      %s73 = sphi 0, %s72
      %s87 = sphi 0, %s73
      %s91 = sphi 0, %s91
      %s93 = sphi 0, %s91
      %s94 = sphi 0, %s93
      %s108 = sphi 0, %s94
      %s112 = sphi 0, %s112
      %s114 = sphi 0, %s112
      %s115 = sphi 0, %s114
      %s129 = sphi 0, %s115
      %s135 = sphi 0, %s137
      %s138 = sphi 0, %s135
      %s139 = sphi 0, %s138
      %s155 = sphi 0, %s139
    $region4: #{tpu_custom_call.1} parent=1 // loop_header_branch
      %18 = sbr.rel (%p16) target = $region8
    $region5: #{tpu_custom_call.1} parent=1 // loop_body
      %s20 = ssub.s32 %s15, 1
      %s21 = ssub.s32 %s15, 2
      %s22 = sadd.s32 %s15, 1
      %s23 = ssub.s32 %s15, %s22
      %p24 = scmp.eq.s32.totalorder %s23, 0
      %s26 = sadd.s32 %s25, 1
      %s27 = scalar_select %p24, %s25, %s26
      %p30 = pneg %p24
      %p31 = scmp.eq.s32.totalorder %s15, 1
      %p32 = por %p30, %p31
      %p33 = scmp.ne.s32.totalorder %s25, %s28
      %p34 = scmp.eq.s32.totalorder %s15, 0
      %p35 = por %p33, %p34
      %p36 = scmp.ne.s32.totalorder %s25, %s28
      %p37 = scmp.eq.s32.totalorder %s20, 1
      %p38 = por %p36, %p37
      %p39 = scmp.ne.s32.totalorder %s28, %s29
      %p40 = scmp.eq.s32.totalorder %s20, 0
      %p41 = por %p39, %p40
      %p42 = scmp.ne.s32.totalorder %s28, %s29
      %p43 = scmp.eq.s32.totalorder %s21, 1
      %p44 = por %p42, %p43
      %p46 = scmp.ne.s32.totalorder %s29, %s45
      %p47 = scmp.eq.s32.totalorder %s21, 0
      %p48 = por %p46, %p47
      %s50 = sadd.s32 %s49, 1
      %p53 = scmp.eq.s32.totalorder %s15, 1
      %p54 = scmp.ne.s32.totalorder %s49, %s51
      %p55 = scmp.eq.s32.totalorder %s15, 0
      %p56 = por %p54, %p55
      %p57 = scmp.ne.s32.totalorder %s49, %s51
      %p58 = scmp.eq.s32.totalorder %s20, 1
      %p59 = por %p57, %p58
      %p60 = scmp.ne.s32.totalorder %s51, %s52
      %p61 = scmp.eq.s32.totalorder %s20, 0
      %p62 = por %p60, %p61
      %p63 = scmp.ne.s32.totalorder %s51, %s52
      %p64 = scmp.eq.s32.totalorder %s21, 1
      %p65 = por %p63, %p64
      %p67 = scmp.ne.s32.totalorder %s52, %s66
      %p68 = scmp.eq.s32.totalorder %s21, 0
      %p69 = por %p67, %p68
      %s71 = sadd.s32 %s70, 1
      %p74 = scmp.eq.s32.totalorder %s15, 1
      %p75 = scmp.ne.s32.totalorder %s70, %s72
      %p76 = scmp.eq.s32.totalorder %s15, 0
      %p77 = por %p75, %p76
      %p78 = scmp.ne.s32.totalorder %s70, %s72
      %p79 = scmp.eq.s32.totalorder %s20, 1
      %p80 = por %p78, %p79
      %p81 = scmp.ne.s32.totalorder %s72, %s73
      %p82 = scmp.eq.s32.totalorder %s20, 0
      %p83 = por %p81, %p82
      %p84 = scmp.ne.s32.totalorder %s72, %s73
      %p85 = scmp.eq.s32.totalorder %s21, 1
      %p86 = por %p84, %p85
      %p88 = scmp.ne.s32.totalorder %s73, %s87
      %p89 = scmp.eq.s32.totalorder %s21, 0
      %p90 = por %p88, %p89
      %s92 = sadd.s32 %s91, 1
      %p95 = scmp.eq.s32.totalorder %s15, 1
      %p96 = scmp.ne.s32.totalorder %s91, %s93
      %p97 = scmp.eq.s32.totalorder %s15, 0
      %p98 = por %p96, %p97
      %p99 = scmp.ne.s32.totalorder %s91, %s93
      %p100 = scmp.eq.s32.totalorder %s20, 1
      %p101 = por %p99, %p100
      %p102 = scmp.ne.s32.totalorder %s93, %s94
      %p103 = scmp.eq.s32.totalorder %s20, 0
      %p104 = por %p102, %p103
      %p105 = scmp.ne.s32.totalorder %s93, %s94
      %p106 = scmp.eq.s32.totalorder %s21, 1
      %p107 = por %p105, %p106
      %p109 = scmp.ne.s32.totalorder %s94, %s108
      %p110 = scmp.eq.s32.totalorder %s21, 0
      %p111 = por %p109, %p110
      %s113 = sadd.s32 %s112, 1
      %p116 = scmp.eq.s32.totalorder %s15, 1
      %p117 = scmp.ne.s32.totalorder %s112, %s114
      %p118 = scmp.eq.s32.totalorder %s15, 0
      %p119 = por %p117, %p118
      %p120 = scmp.ne.s32.totalorder %s112, %s114
      %p121 = scmp.eq.s32.totalorder %s20, 1
      %p122 = por %p120, %p121
      %p123 = scmp.ne.s32.totalorder %s114, %s115
      %p124 = scmp.eq.s32.totalorder %s20, 0
      %p125 = por %p123, %p124
      %p126 = scmp.ne.s32.totalorder %s114, %s115
      %p127 = scmp.eq.s32.totalorder %s21, 1
      %p128 = por %p126, %p127
      %p130 = scmp.ne.s32.totalorder %s115, %s129
      %p131 = scmp.eq.s32.totalorder %s21, 0
      %p132 = por %p130, %p131
      %s133 = ssub.s32 %s15, %s22
      %p134 = scmp.eq.s32.totalorder %s133, 0
      %s136 = sadd.s32 %s135, 1
      %s137 = scalar_select %p134, %s135, %s136
      %p140 = pneg %p134
      %p141 = scmp.eq.s32.totalorder %s15, 1
      %p142 = por %p140, %p141
      %p143 = scmp.ne.s32.totalorder %s135, %s138
      %p144 = scmp.eq.s32.totalorder %s15, 0
      %p145 = por %p143, %p144
      %p146 = scmp.ne.s32.totalorder %s135, %s138
      %p147 = scmp.eq.s32.totalorder %s20, 1
      %p148 = por %p146, %p147
      %p149 = scmp.ne.s32.totalorder %s138, %s139
      %p150 = scmp.eq.s32.totalorder %s20, 0
      %p151 = por %p149, %p150
      %p152 = scmp.ne.s32.totalorder %s138, %s139
      %p153 = scmp.eq.s32.totalorder %s21, 1
      %p154 = por %p152, %p153
      %p156 = scmp.ne.s32.totalorder %s139, %s155
      %p157 = scmp.eq.s32.totalorder %s21, 0
      %p158 = por %p156, %p157
      %p159 = scmp.le.s32.totalorder 1, %s15
      %p160 = scmp.lt.s32.totalorder %s15, 3
      %p161 = pnand %p159, %p160
      %p162 = pneg %p161
      // Predicated region
      $region9: #{tpu_custom_call.1} parent=5 // pred_check
        _
      $region10: #{tpu_custom_call.1} parent=5 // pred_check_branch
        %164 = sbr.rel (%p161) target = $region12
      $region11: #{tpu_custom_call.1} parent=5 // pred_region
        %s165 = ssub.s32 %s15, 1
        // Predicated region
        $region13: #{tpu_custom_call.1} parent=11 // pred_check
          %p166 = pneg %p62
        $region14: #{tpu_custom_call.1} parent=11 // pred_check_branch
          %168 = sbr.rel (%p166) target = $region16
        $region15: #{tpu_custom_call.1} parent=11 // pred_region
          _
        $region16: #{tpu_custom_call.1} parent=11 // pred_fallthru
          _
        // Predicated region
        $region17: #{tpu_custom_call.1} parent=11 // pred_check
          %p169 = pneg %p83
        $region18: #{tpu_custom_call.1} parent=11 // pred_check_branch
          %171 = sbr.rel (%p169) target = $region20
        $region19: #{tpu_custom_call.1} parent=11 // pred_region
          _
        $region20: #{tpu_custom_call.1} parent=11 // pred_fallthru
          _
        // Predicated region
        $region21: #{tpu_custom_call.1} parent=11 // pred_check
          %p172 = pneg %p104
        $region22: #{tpu_custom_call.1} parent=11 // pred_check_branch
          %174 = sbr.rel (%p172) target = $region24
        $region23: #{tpu_custom_call.1} parent=11 // pred_region
          %s176 = ssub.s32 2048, 2048
          %177 = vsyncadd [#allocation3], %s176
          %s178 = sshll.u32 [#allocation2], 4
          %s179 = int_to_ptr.vmem [resolvable:$true] %s178
          %184 = dma.hbm_to_vmem [thread:$0]  %s3, 2048, %s179, [#allocation3], 128, 128, 8
        $region24: #{tpu_custom_call.1} parent=11 // pred_fallthru
          _
        // Predicated region
        $region25: #{tpu_custom_call.1} parent=11 // pred_check
          %p185 = pneg %p125
        $region26: #{tpu_custom_call.1} parent=11 // pred_check_branch
          %187 = sbr.rel (%p185) target = $region28
        $region27: #{tpu_custom_call.1} parent=11 // pred_region
          _
        $region28: #{tpu_custom_call.1} parent=11 // pred_fallthru
          _
      $region12: #{tpu_custom_call.1} parent=5 // pred_fallthru
        _
      %p188 = scmp.lt.s32.totalorder %s15, 2
      // Predicated region
      $region29: #{tpu_custom_call.1} parent=5 // pred_check
        %p189 = pneg %p188
      $region30: #{tpu_custom_call.1} parent=5 // pred_check_branch
        %191 = sbr.rel (%p189) target = $region32
      $region31: #{tpu_custom_call.1} parent=5 // pred_region
        // Predicated region
        $region33: #{tpu_custom_call.1} parent=31 // pred_check
          %p192 = pneg %p35
        $region34: #{tpu_custom_call.1} parent=31 // pred_check_branch
          %194 = sbr.rel (%p192) target = $region36
        $region35: #{tpu_custom_call.1} parent=31 // pred_region
          %p195 = scmp.lt.s32.totalorder %s15, 1
          %s196 = scalar_select %p195, %s15, 1
          %s197 = smul.addr %s196, 8
          %s198 = scalar_lea.vmem %s0, %s197
        $region36: #{tpu_custom_call.1} parent=31 // pred_fallthru
          _
      $region32: #{tpu_custom_call.1} parent=5 // pred_fallthru
        _
      %p199 = scmp.le.s32.totalorder 1, %s15
      %p200 = scmp.lt.s32.totalorder %s15, 3
      %p201 = pnand %p199, %p200
      %p202 = pneg %p201
      // Predicated region
      $region37: #{tpu_custom_call.1} parent=5 // pred_check
        _
      $region38: #{tpu_custom_call.1} parent=5 // pred_check_branch
        %204 = sbr.rel (%p201) target = $region40
      $region39: #{tpu_custom_call.1} parent=5 // pred_region
        %s205 = ssub.s32 %s15, 1
        // Predicated region
        $region41: #{tpu_custom_call.1} parent=39 // pred_check
          %p206 = pneg %p104
        $region42: #{tpu_custom_call.1} parent=39 // pred_check_branch
          %208 = sbr.rel (%p206) target = $region44
        $region43: #{tpu_custom_call.1} parent=39 // pred_region
          %209 = dma.done [#allocation3], 2048
        $region44: #{tpu_custom_call.1} parent=39 // pred_fallthru
          _
        %p210 = scmp.lt.s32.totalorder %s20, 1
        %s211 = scalar_select %p210, %s20, 1
        %s212 = smul.addr %s211, 8
        %s213 = scalar_lea.vmem %s0, %s212
        %p214 = pneg %p41
        %p215 = pneg %p38
        %p216 = pneg %p62
        %p217 = pneg %p59
        %p218 = pneg %p83
        %p219 = pneg %p80
        %p220 = pneg %p104
        %p221 = pneg %p101
        %p222 = pneg %p125
        %p223 = pneg %p122
        %p224 = pneg %p151
        %p225 = pneg %p148
        %s226 = sand.u32 %s138, 1
        %s227 = scalar_lea.sflag [#allocation4], %s226
        %s228 = sand.u32 %s138, 1
        %s229 = smul.addr %s228, 8
        %s230 = scalar_lea.vmem [#allocation5], %s229
        %p231 = scmp.lt.s32.totalorder %s20, 1
        %s232 = scalar_select %p231, %s20, 1
        %s233 = smul.addr %s232, 8
        %s234 = scalar_lea.vmem %s0, %s233
        %v235 = vld [vmem:[%s234] sm:$0xff]
        %v236 = vld [vmem:[%s1] sm:$0xf]
        %v237 = vld [vmem:[%s2] sm:$0x1]
        %v239 = vlaneseq
        %v240 = vshrl.u32 %v239, 7
        %v241 = vsub.s32 0, %v240
        %v242 = vrot.slane %v237, %v241
        %vm244 = vcmask 31744
        %v246 = vsel %vm244, %v235, 0
        %vm248 = vcmask 1043456
        %v250 = vsel %vm248, %v236, 0
        %252 = vmatprep.subr.mxu0 0.0
        %253 = vmatpush1.msra.mxu0 %v250
        %254 = vmatprep.subr.mxu0 0.0
        %255 = vmatpush1.msra.mxu0 0.0
        %256 = vmatprep.subr.mxu0 0.0
        %257 = vmatpush1.msra.mxu0 0.0
        %258 = vmatprep.subr.mxu0 0.0
        %259 = vmatpush1.msra.mxu0 0.0
        %260 = vmatprep.subr.mxu0 0.0
        %261 = vmatpush1.msra.mxu0 0.0
        %262 = vmatprep.subr.mxu0 0.0
        %263 = vmatpush1.msra.mxu0 0.0
        %264 = vmatprep.subr.mxu0 0.0
        %265 = vmatpush1.msra.mxu0 0.0
        %266 = vmatprep.subr.mxu0 0.0
        %267 = vmatpush1.msra.mxu0 0.0
        %268 = vmatprep.subr.mxu0 0.0
        %269 = vmatpush1.msra.mxu0 0.0
        %270 = vmatprep.subr.mxu0 0.0
        %271 = vmatpush1.msra.mxu0 0.0
        %272 = vmatprep.subr.mxu0 0.0
        %273 = vmatpush1.msra.mxu0 0.0
        %274 = vmatprep.subr.mxu0 0.0
        %275 = vmatpush1.msra.mxu0 0.0
        %276 = vmatprep.subr.mxu0 0.0
        %277 = vmatpush1.msra.mxu0 0.0
        %278 = vmatprep.subr.mxu0 0.0
        %279 = vmatpush1.msra.mxu0 0.0
        %280 = vmatprep.subr.mxu0 0.0
        %281 = vmatpush1.msra.mxu0 0.0
        %282 = vmatprep.subr.mxu0 0.0
        %283 = vmatpush1.msra.mxu0 0.0
        %284 = vmatprep.subr.mxu0 0.0
        %285 = vmatpush1.msra.mxu0 0.0
        %286 = vmatprep.subr.mxu0 0.0
        %287 = vmatpush1.msra.mxu0 0.0
        %288 = vmatprep.subr.mxu0 0.0
        %289 = vmatpush1.msra.mxu0 0.0
        %290 = vmatprep.subr.mxu0 0.0
        %291 = vmatpush1.msra.mxu0 0.0
        %292 = vmatprep.subr.mxu0 0.0
        %293 = vmatpush1.msra.mxu0 0.0
        %294 = vmatprep.subr.mxu0 0.0
        %295 = vmatpush1.msra.mxu0 0.0
        %296 = vmatprep.subr.mxu0 0.0
        %297 = vmatpush1.msra.mxu0 0.0
        %298 = vmatprep.subr.mxu0 0.0
        %299 = vmatpush1.msra.mxu0 0.0
        %300 = vmatprep.subr.mxu0 0.0
        %301 = vmatpush1.msra.mxu0 0.0
        %302 = vmatprep.subr.mxu0 0.0
        %303 = vmatpush1.msra.mxu0 0.0
        %304 = vmatprep.subr.mxu0 0.0
        %305 = vmatpush1.msra.mxu0 0.0
        %306 = vmatprep.subr.mxu0 0.0
        %307 = vmatpush1.msra.mxu0 0.0
        %308 = vmatprep.subr.mxu0 0.0
        %309 = vmatpush1.msra.mxu0 0.0
        %310 = vmatprep.subr.mxu0 0.0
        %311 = vmatpush1.msra.mxu0 0.0
        %312 = vmatprep.subr.mxu0 0.0
        %313 = vmatpush1.msra.mxu0 0.0
        %314 = vmatprep.subr.mxu0 0.0
        %315 = vmatpush1.msra.mxu0 0.0
        %316 = vmatprep.mubr.f32.mxu0 0.0
        %317 = vmatmul.mubr.f32.gmra.mrb[0].mxu0 %v246
        %v318 = vpop.f32.mrb[0].mxu0
        %v319 = vadd.f32 %v242, %v318
        %v320 = vpop.f32.mrb[0].mxu0
        %321 = vdwg.mxu0
        %v322 = vld [vmem:[#allocation2] sm:$0xff]
        %v323 = vld [vmem:[#allocation2 + $0x8] sm:$0xff]
        %v324 = vld [vmem:[#allocation2 + $0x10] sm:$0xff]
        %v325 = vld [vmem:[#allocation2 + $0x18] sm:$0xff]
        %v326 = vld [vmem:[#allocation2 + $0x20] sm:$0xff]
        %v327 = vld [vmem:[#allocation2 + $0x28] sm:$0xff]
        %v328 = vld [vmem:[#allocation2 + $0x30] sm:$0xff]
        %v329 = vld [vmem:[#allocation2 + $0x38] sm:$0xff]
        %v330 = vld [vmem:[#allocation2 + $0x40] sm:$0xff]
        %v331 = vld [vmem:[#allocation2 + $0x48] sm:$0xff]
        %v332 = vld [vmem:[#allocation2 + $0x50] sm:$0xff]
        %v333 = vld [vmem:[#allocation2 + $0x58] sm:$0xff]
        %v334 = vld [vmem:[#allocation2 + $0x60] sm:$0xff]
        %v335 = vld [vmem:[#allocation2 + $0x68] sm:$0xff]
        %v336 = vld [vmem:[#allocation2 + $0x70] sm:$0xff]
        %v337 = vld [vmem:[#allocation2 + $0x78] sm:$0xff]
        %v338 = vld [vmem:[%s4] sm:$0x1]
        %v340 = vlaneseq
        %v341 = vshrl.u32 %v340, 7
        %v342 = vsub.s32 0, %v341
        %v343 = vrot.slane %v338, %v342
        %345 = vmatprep.subr.mxu0 0.0
        %346 = vmatpush1.msra.mxu0 %v322
        %347 = vmatprep.subr.mxu0 0.0
        %348 = vmatpush1.msra.mxu0 %v323
        %349 = vmatprep.subr.mxu0 0.0
        %350 = vmatpush1.msra.mxu0 %v324
        %351 = vmatprep.subr.mxu0 0.0
        %352 = vmatpush1.msra.mxu0 %v325
        %353 = vmatprep.subr.mxu0 0.0
        %354 = vmatpush1.msra.mxu0 %v326
        %355 = vmatprep.subr.mxu0 0.0
        %356 = vmatpush1.msra.mxu0 %v327
        %357 = vmatprep.subr.mxu0 0.0
        %358 = vmatpush1.msra.mxu0 %v328
        %359 = vmatprep.subr.mxu0 0.0
        %360 = vmatpush1.msra.mxu0 %v329
        %361 = vmatprep.subr.mxu0 0.0
        %362 = vmatpush1.msra.mxu0 %v330
        %363 = vmatprep.subr.mxu0 0.0
        %364 = vmatpush1.msra.mxu0 %v331
        %365 = vmatprep.subr.mxu0 0.0
        %366 = vmatpush1.msra.mxu0 %v332
        %367 = vmatprep.subr.mxu0 0.0
        %368 = vmatpush1.msra.mxu0 %v333
        %369 = vmatprep.subr.mxu0 0.0
        %370 = vmatpush1.msra.mxu0 %v334
        %371 = vmatprep.subr.mxu0 0.0
        %372 = vmatpush1.msra.mxu0 %v335
        %373 = vmatprep.subr.mxu0 0.0
        %374 = vmatpush1.msra.mxu0 %v336
        %375 = vmatprep.subr.mxu0 0.0
        %376 = vmatpush1.msra.mxu0 %v337
        %377 = vmatprep.subr.mxu0 0.0
        %378 = vmatpush1.msra.mxu0 0.0
        %379 = vmatprep.subr.mxu0 0.0
        %380 = vmatpush1.msra.mxu0 0.0
        %381 = vmatprep.subr.mxu0 0.0
        %382 = vmatpush1.msra.mxu0 0.0
        %383 = vmatprep.subr.mxu0 0.0
        %384 = vmatpush1.msra.mxu0 0.0
        %385 = vmatprep.subr.mxu0 0.0
        %386 = vmatpush1.msra.mxu0 0.0
        %387 = vmatprep.subr.mxu0 0.0
        %388 = vmatpush1.msra.mxu0 0.0
        %389 = vmatprep.subr.mxu0 0.0
        %390 = vmatpush1.msra.mxu0 0.0
        %391 = vmatprep.subr.mxu0 0.0
        %392 = vmatpush1.msra.mxu0 0.0
        %393 = vmatprep.subr.mxu0 0.0
        %394 = vmatpush1.msra.mxu0 0.0
        %395 = vmatprep.subr.mxu0 0.0
        %396 = vmatpush1.msra.mxu0 0.0
        %397 = vmatprep.subr.mxu0 0.0
        %398 = vmatpush1.msra.mxu0 0.0
        %399 = vmatprep.subr.mxu0 0.0
        %400 = vmatpush1.msra.mxu0 0.0
        %401 = vmatprep.subr.mxu0 0.0
        %402 = vmatpush1.msra.mxu0 0.0
        %403 = vmatprep.subr.mxu0 0.0
        %404 = vmatpush1.msra.mxu0 0.0
        %405 = vmatprep.subr.mxu0 0.0
        %406 = vmatpush1.msra.mxu0 0.0
        %407 = vmatprep.subr.mxu0 0.0
        %408 = vmatpush1.msra.mxu0 0.0
        %409 = vmatprep.mubr.f32.mxu0 0.0
        %410 = vmatmul.mubr.f32.gmra.mrb[0].mxu0 %v319
        %v411 = vpop.f32.mrb[0].mxu0
        %v412 = vadd.f32 %v343, %v411
        %v413 = vpop.f32.mrb[0].mxu0
        %414 = vdwg.mxu0
        %v415 = vmax.f32 %v412, 0.0
        %416 = vst [vmem:[%s230] sm:$0xff] %v415
        %s417 = sand.u32 %s138, 1
        %s418 = scalar_lea.sflag [#allocation4], %s417
        %s419 = sand.u32 %s138, 1
        %s420 = smul.addr %s419, 8
        %s421 = scalar_lea.vmem [#allocation5], %s420
        // Predicated region
        $region45: #{tpu_custom_call.1} parent=39 // pred_check
          %p422 = pneg %p148
        $region46: #{tpu_custom_call.1} parent=39 // pred_check_branch
          %424 = sbr.rel (%p422) target = $region48
        $region47: #{tpu_custom_call.1} parent=39 // pred_region
          %s426 = ssub.s32 128, 128
          %427 = vsyncadd %s418, %s426
          %s428 = smul.addr %s20, 128
          %s429 = scalar_lea.hbm %s5, %s428
          %s431 = sshll.u32 %s421, 4
          %s432 = int_to_ptr.vmem [resolvable:$true] %s431
          %434 = dma.vmem_to_hbm [thread:$0]  %s432, 128, %s429, %s418
        $region48: #{tpu_custom_call.1} parent=39 // pred_fallthru
          _
      $region40: #{tpu_custom_call.1} parent=5 // pred_fallthru
        _
      %p435 = scmp.le.s32.totalorder 2, %s15
      // Predicated region
      $region49: #{tpu_custom_call.1} parent=5 // pred_check
        %p436 = pneg %p435
      $region50: #{tpu_custom_call.1} parent=5 // pred_check_branch
        %438 = sbr.rel (%p436) target = $region52
      $region51: #{tpu_custom_call.1} parent=5 // pred_region
        %s439 = ssub.s32 %s15, 2
        // Predicated region
        $region53: #{tpu_custom_call.1} parent=51 // pred_check
          %p440 = pneg %p154
        $region54: #{tpu_custom_call.1} parent=51 // pred_check_branch
          %442 = sbr.rel (%p440) target = $region56
        $region55: #{tpu_custom_call.1} parent=51 // pred_region
          %s443 = sand.u32 %s139, 1
          %s444 = scalar_lea.sflag [#allocation4], %s443
          %s445 = sand.u32 %s139, 1
          %s446 = smul.addr %s445, 8
          %s447 = scalar_lea.vmem [#allocation5], %s446
          %448 = dma.done %s444, 128
        $region56: #{tpu_custom_call.1} parent=51 // pred_fallthru
          _
      $region52: #{tpu_custom_call.1} parent=5 // pred_fallthru
        _
    $region6: #{tpu_custom_call.1} parent=1 // loop_footer
      %s19 = sadd.s32 1, %s15
    $region7: #{tpu_custom_call.1} parent=1 // loop_footer_branch
      %14 = sbr.rel target = $region3
    $region8: #{tpu_custom_call.1} parent=1 // loop_exit
      _
    %449 = vsyncpa [#allocation3], 1
    %s450 = scalar_lea.sflag [#allocation3], 1
    %451 = vsyncpa %s450, 1
    %452 = vsyncpa [#allocation4], 1
    %s453 = scalar_lea.sflag [#allocation4], 1
    %454 = vsyncpa %s453, 1

</llo_original>
